<compile_context>
chip_gen: v5e
topology: v5e:2x2
jax: 0.10.0
libtpu: 0.0.40
codegen_flags: <defaults>
</compile_context>

<pallas_src>
import jax
import jax.numpy as jnp
from jax.experimental import pallas as pl
from jax.experimental.pallas import tpu as pltpu


def mlp_kernel(xT_ref, w1t_ref, b1_ref, w2t_ref, b2_ref, w3t_ref, b3_ref, o_ref):
    """All operands transposed: x (in_dim, tb), wN^T (out, in), biases (out, 1).

    Activations are (H, tb) -> batch rides the 128-lane axis; output is (1, tb).
    Matmuls run in the storage dtype (bf16) with f32 accumulation; bias-add and
    ReLU stay f32 (cheap VPU work, v5e-safe), cast back only for the next MXU op.
    """
    w_dtype = w2t_ref.dtype
    xT = xT_ref[...]                                                        # (in_dim, tb)

    h = jnp.dot(w1t_ref[...], xT, preferred_element_type=jnp.float32)      # (H, tb) f32
    h = jnp.maximum(h + b1_ref[...], 0.0).astype(w_dtype)                   # bias (H,1) bcast

    h = jnp.dot(w2t_ref[...], h, preferred_element_type=jnp.float32)       # (H, tb) f32
    h = jnp.maximum(h + b2_ref[...], 0.0).astype(w_dtype)

    out = jnp.dot(w3t_ref[...], h, preferred_element_type=jnp.float32)     # (1, tb) f32
    out = out + b3_ref[...]
    o_ref[...] = out.astype(o_ref.dtype)


def _pick_tb(B):
    """Lane-aligned batch tile.  Prefer 512 (~85% of HBM roofline), then 256,
    then 1024/128; require >= 2 grid steps so v7x can shard the parallel axis.
    Fall back to the whole batch (grid=(1,)) for small B."""
    if B % 128 != 0:
        return B
    for cand in (512, 256, 1024, 128):
        if B % cand == 0 and B // cand >= 2:
            return cand
    return B


def sin2d_mlp(x, w1, b1, w2, b2, w3, b3, *, tb=None, compute_dtype=jnp.bfloat16):
    """x: (B, in_dim) f32.  w1 (in_dim, H), w2 (H, H), w3 (H, 1); biases (1, out).

    Returns (B, 1) float32, matching the PyTorch forward x @ W.T + b chain.
    """
    B, in_dim = x.shape
    H = w1.shape[1]
    if tb is None:
        tb = _pick_tb(B)
    assert B % tb == 0
    assert tb == B or tb % 128 == 0, "batch tile must be 128-lane aligned or the full batch"

    # ---- wrapper-side layout plumbing: batch on lanes, bf16 streaming ----
    xT  = x.T.astype(compute_dtype)                       # (in_dim, B)
    w1t = w1.T.astype(compute_dtype)                      # (H, in_dim)
    w2t = w2.T.astype(compute_dtype)                      # (H, H)
    w3t = w3.T.astype(compute_dtype)                      # (1, H)
    b1c = jnp.reshape(b1, (1, H)).T.astype(jnp.float32)   # (H, 1) f32
    b2c = jnp.reshape(b2, (1, H)).T.astype(jnp.float32)   # (H, 1) f32
    b3c = jnp.reshape(b3, (1, 1)).astype(jnp.float32)     # (1, 1) f32

    grid = (B // tb,)
    resident = lambda shape: pl.BlockSpec(shape, lambda i: (0, 0))  # weights stay put

    itemsize = jnp.dtype(compute_dtype).itemsize
    flops = 2 * B * (in_dim * H + H * H + H)
    bytes_accessed = (
        xT.size * itemsize
        + (w1t.size + w2t.size + w3t.size) * itemsize
        + (b1c.size + b2c.size + b3c.size) * 4
        + B * 4  # (1, B) f32 output
    )

    outT = pl.pallas_call(
        mlp_kernel,
        out_shape=jax.ShapeDtypeStruct((1, B), jnp.float32),
        grid_spec=pltpu.PrefetchScalarGridSpec(
            num_scalar_prefetch=0,
            grid=grid,
            in_specs=[
                pl.BlockSpec((in_dim, tb), lambda i: (0, i)),  # x tile: batch on lanes
                resident((H, in_dim)),                         # w1^T
                resident((H, 1)),                              # b1
                resident((H, H)),                              # w2^T
                resident((H, 1)),                              # b2
                resident((1, H)),                              # w3^T
                resident((1, 1)),                              # b3
            ],
            out_specs=pl.BlockSpec((1, tb), lambda i: (0, i)),
        ),
        compiler_params=pltpu.CompilerParams(
            dimension_semantics=("parallel",)),
        cost_estimate=pl.CostEstimate(
            flops=flops, transcendentals=0, bytes_accessed=bytes_accessed),
    )(xT, w1t, b1c, w2t, b2c, w3t, b3c)

    return outT.T  # (B, 1) f32


def init_params(key, area_size, hidden_size, dtype=jnp.float32):
    in_dim = area_size * area_size * 2
    k1, k2, k3, k4, k5, k6 = jax.random.split(key, 6)

    def lin(kw, kb, fan_in, fan_out):
        bound = 1.0 / jnp.sqrt(fan_in)
        w = jax.random.uniform(kw, (fan_in, fan_out), dtype, -bound, bound)
        b = jax.random.uniform(kb, (1, fan_out), dtype, -bound, bound)
        return w, b

    w1, b1 = lin(k1, k2, in_dim, hidden_size)
    w2, b2 = lin(k3, k4, hidden_size, hidden_size)
    w3, b3 = lin(k5, k6, hidden_size, 1)
    return w1, b1, w2, b2, w3, b3


def _reference(x, w1, b1, w2, b2, w3, b3, compute_dtype=jnp.bfloat16):
    """Pure-JAX reference mirroring the kernel arithmetic (bf16 operands,
    f32 accumulation, f32 bias+ReLU, re-quantize between layers)."""
    q = lambda a: a.astype(compute_dtype).astype(jnp.float32)
    h = jnp.maximum(q(x) @ q(w1) + b1, 0.0)
    h = jnp.maximum(q(h) @ q(w2) + b2, 0.0)
    return q(h) @ q(w3) + b3


if __name__ == "__main__":
    area_size = 4        # -> input feature dim = 4*4*2 = 32
    hidden_size = 32
    batch = 8

    key = jax.random.PRNGKey(0)
    kx, kp = jax.random.split(key)
    in_dim = area_size * area_size * 2
    w1, b1, w2, b2, w3, b3 = init_params(kp, area_size, hidden_size)

    # Small batch: grid=(1,), block shapes equal full array dims.
    x_small = jax.random.normal(kx, (batch, in_dim), jnp.float32)
    out_small = jax.block_until_ready(sin2d_mlp(x_small, w1, b1, w2, b2, w3, b3))
    ref_small = _reference(x_small, w1, b1, w2, b2, w3, b3)
    assert out_small.shape == (batch, 1)
    assert jnp.allclose(out_small, ref_small, atol=1e-4, rtol=1e-4)

    # Larger batch: exercises the lane-aligned tiling (tb=128, grid=(2,)).
    x_big = jax.random.normal(kx, (256, in_dim), jnp.float32)
    out_big = jax.block_until_ready(sin2d_mlp(x_big, w1, b1, w2, b2, w3, b3))
    ref_big = _reference(x_big, w1, b1, w2, b2, w3, b3)
    assert out_big.shape == (256, 1)
    assert jnp.allclose(out_big, ref_big, atol=1e-4, rtol=1e-4)

    print("KERNEL_OK")
</pallas_src>

<mosaic_0001>
module attributes {stable_mosaic.version = 11 : i64} {
  func.func @mlp_kernel(%arg0: i32, %arg1: memref<32x8xbf16, #tpu.memory_space<vmem>>, %arg2: memref<32x32xbf16, #tpu.memory_space<vmem>>, %arg3: memref<32x1xf32, #tpu.memory_space<vmem>>, %arg4: memref<32x32xbf16, #tpu.memory_space<vmem>>, %arg5: memref<32x1xf32, #tpu.memory_space<vmem>>, %arg6: memref<1x32xbf16, #tpu.memory_space<vmem>>, %arg7: memref<1x1xf32, #tpu.memory_space<vmem>>, %arg8: memref<1x8xf32, #tpu.memory_space<vmem>>) attributes {dimension_semantics = [#tpu.dimension_semantics<parallel>], iteration_bounds = array<i64: 1>, scalar_prefetch = 0 : i64, scratch_operands = 0 : i64, tpu.core_type = #tpu.core_type<tc>, window_params = [{transform_indices = @transform_0, window_bounds = array<i64: 32, 8>}, {pipeline_mode = #tpu.pipeline_mode<synchronous>, transform_indices = @transform_1, window_bounds = array<i64: 32, 32>}, {pipeline_mode = #tpu.pipeline_mode<synchronous>, transform_indices = @transform_2, window_bounds = array<i64: 32, 1>}, {pipeline_mode = #tpu.pipeline_mode<synchronous>, transform_indices = @transform_3, window_bounds = array<i64: 32, 32>}, {pipeline_mode = #tpu.pipeline_mode<synchronous>, transform_indices = @transform_4, window_bounds = array<i64: 32, 1>}, {pipeline_mode = #tpu.pipeline_mode<synchronous>, transform_indices = @transform_5, window_bounds = array<i64: 1, 32>}, {pipeline_mode = #tpu.pipeline_mode<synchronous>, transform_indices = @transform_6, window_bounds = array<i64: 1, 1>}, {transform_indices = @transform_7, window_bounds = array<i64: 1, 8>}]} {
    %c0 = arith.constant 0 : index
    %c0_0 = arith.constant 0 : index
    %0 = vector.load %arg1[%c0, %c0_0] : memref<32x8xbf16, #tpu.memory_space<vmem>>, vector<32x8xbf16>
    %c0_1 = arith.constant 0 : index
    %c0_2 = arith.constant 0 : index
    %1 = vector.load %arg2[%c0_1, %c0_2] : memref<32x32xbf16, #tpu.memory_space<vmem>>, vector<32x32xbf16>
    %cst = arith.constant dense<0.000000e+00> : vector<32x8xf32>
    %2 = tpu.matmul %1, %0, %cst {dimension_numbers = #tpu.dot_dimension_numbers<[1], [0], [0], [1], [0, 0, 1, 1], [], []>} : vector<32x32xbf16>, vector<32x8xbf16>, vector<32x8xf32> -> vector<32x8xf32>
    %c0_3 = arith.constant 0 : index
    %c0_4 = arith.constant 0 : index
    %3 = vector.load %arg3[%c0_3, %c0_4] : memref<32x1xf32, #tpu.memory_space<vmem>>, vector<32x1xf32>
    %4 = vector.broadcast %3 : vector<32x1xf32> to vector<32x8xf32>
    %5 = arith.addf %2, %4 : vector<32x8xf32>
    %cst_5 = arith.constant 0.000000e+00 : f32
    %6 = vector.broadcast %cst_5 : f32 to vector<32x8xf32>
    %7 = arith.maximumf %5, %6 : vector<32x8xf32>
    %8 = arith.truncf %7 : vector<32x8xf32> to vector<32x8xbf16>
    %c0_6 = arith.constant 0 : index
    %c0_7 = arith.constant 0 : index
    %9 = vector.load %arg4[%c0_6, %c0_7] : memref<32x32xbf16, #tpu.memory_space<vmem>>, vector<32x32xbf16>
    %cst_8 = arith.constant dense<0.000000e+00> : vector<32x8xf32>
    %10 = tpu.matmul %9, %8, %cst_8 {dimension_numbers = #tpu.dot_dimension_numbers<[1], [0], [0], [1], [0, 0, 1, 1], [], []>} : vector<32x32xbf16>, vector<32x8xbf16>, vector<32x8xf32> -> vector<32x8xf32>
    %c0_9 = arith.constant 0 : index
    %c0_10 = arith.constant 0 : index
    %11 = vector.load %arg5[%c0_9, %c0_10] : memref<32x1xf32, #tpu.memory_space<vmem>>, vector<32x1xf32>
    %12 = vector.broadcast %11 : vector<32x1xf32> to vector<32x8xf32>
    %13 = arith.addf %10, %12 : vector<32x8xf32>
    %cst_11 = arith.constant 0.000000e+00 : f32
    %14 = vector.broadcast %cst_11 : f32 to vector<32x8xf32>
    %15 = arith.maximumf %13, %14 : vector<32x8xf32>
    %16 = arith.truncf %15 : vector<32x8xf32> to vector<32x8xbf16>
    %c0_12 = arith.constant 0 : index
    %c0_13 = arith.constant 0 : index
    %17 = vector.load %arg6[%c0_12, %c0_13] : memref<1x32xbf16, #tpu.memory_space<vmem>>, vector<1x32xbf16>
    %cst_14 = arith.constant dense<0.000000e+00> : vector<1x8xf32>
    %18 = tpu.matmul %17, %16, %cst_14 {dimension_numbers = #tpu.dot_dimension_numbers<[1], [0], [0], [1], [0, 0, 1, 1], [], []>} : vector<1x32xbf16>, vector<32x8xbf16>, vector<1x8xf32> -> vector<1x8xf32>
    %c0_15 = arith.constant 0 : index
    %c0_16 = arith.constant 0 : index
    %19 = vector.load %arg7[%c0_15, %c0_16] : memref<1x1xf32, #tpu.memory_space<vmem>>, vector<1x1xf32>
    %20 = vector.broadcast %19 : vector<1x1xf32> to vector<1x8xf32>
    %21 = arith.addf %18, %20 : vector<1x8xf32>
    %c0_17 = arith.constant 0 : index
    %c0_18 = arith.constant 0 : index
    %22 = vector.load %arg8[%c0_17, %c0_18] : memref<1x8xf32, #tpu.memory_space<vmem>>, vector<1x8xf32>
    tpu.vector_store %arg8[%c0_17, %c0_18], %21 {strides = array<i32>} : memref<1x8xf32, #tpu.memory_space<vmem>>, vector<1x8xf32>,
    return
  }
  func.func @transform_0(%arg0: i32) -> (i32, i32) {
    %c0_i32 = arith.constant 0 : i32
    %c0_i32_0 = arith.constant 0 : i32
    return %c0_i32, %arg0 : i32, i32
  }
  func.func @transform_1(%arg0: i32) -> (i32, i32) {
    %c0_i32 = arith.constant 0 : i32
    %c0_i32_0 = arith.constant 0 : i32
    %c0_i32_1 = arith.constant 0 : i32
    return %c0_i32, %c0_i32_0 : i32, i32
  }
  func.func @transform_2(%arg0: i32) -> (i32, i32) {
    %c0_i32 = arith.constant 0 : i32
    %c0_i32_0 = arith.constant 0 : i32
    %c0_i32_1 = arith.constant 0 : i32
    return %c0_i32, %c0_i32_0 : i32, i32
  }
  func.func @transform_3(%arg0: i32) -> (i32, i32) {
    %c0_i32 = arith.constant 0 : i32
    %c0_i32_0 = arith.constant 0 : i32
    %c0_i32_1 = arith.constant 0 : i32
    return %c0_i32, %c0_i32_0 : i32, i32
  }
  func.func @transform_4(%arg0: i32) -> (i32, i32) {
    %c0_i32 = arith.constant 0 : i32
    %c0_i32_0 = arith.constant 0 : i32
    %c0_i32_1 = arith.constant 0 : i32
    return %c0_i32, %c0_i32_0 : i32, i32
  }
  func.func @transform_5(%arg0: i32) -> (i32, i32) {
    %c0_i32 = arith.constant 0 : i32
    %c0_i32_0 = arith.constant 0 : i32
    %c0_i32_1 = arith.constant 0 : i32
    return %c0_i32, %c0_i32_0 : i32, i32
  }
  func.func @transform_6(%arg0: i32) -> (i32, i32) {
    %c0_i32 = arith.constant 0 : i32
    %c0_i32_0 = arith.constant 0 : i32
    %c0_i32_1 = arith.constant 0 : i32
    return %c0_i32, %c0_i32_0 : i32, i32
  }
  func.func @transform_7(%arg0: i32) -> (i32, i32) {
    %c0_i32 = arith.constant 0 : i32
    %c0_i32_0 = arith.constant 0 : i32
    return %c0_i32, %arg0 : i32, i32
  }
}

</mosaic_0001>

<llo_original>
// kernel: tpu_custom_call.1
$region0: #{tpu_custom_call.1}
  #allocation0 [shape = 'u32[]', space=smem, size = 0x4, offset = 0x4, fixed_abs, tag = 'smem constant byte address 0x4 - core index']
  #allocation1 [shape = 'u32[72,128]{1,0:T(1,128)}', space=vmem, size = 0x9000, scoped, tag = 'internal scratch']
  #allocation2 [shape = 'f32[1,1]{1,0:T(1,128)S(1)}', space=vmem, size = 0x200, scoped, tag = 'scoped memory for tpu_custom_call.1']
  %s0 = inlined_call_operand.vmem [shape: bf16[32,8], index: 0, kind: input, shape index: {}]
  %s1 = inlined_call_operand.vmem [shape: bf16[32,32], index: 1, kind: input, shape index: {}]
  %s2 = inlined_call_operand.vmem [shape: f32[32,1], index: 2, kind: input, shape index: {}]
  %s3 = inlined_call_operand.vmem [shape: bf16[32,32], index: 3, kind: input, shape index: {}]
  %s4 = inlined_call_operand.vmem [shape: f32[32,1], index: 4, kind: input, shape index: {}]
  %s5 = inlined_call_operand.vmem [shape: bf16[1,32], index: 5, kind: input, shape index: {}]
  %s6 = inlined_call_operand.<no memory space> [shape: f32[1,1], index: 6, kind: input, shape index: {}]
  %s7 = inlined_call_operand.hbm [shape: f32[1,8], index: 7, kind: output, shape index: {}]
  %s8 = sld [smem:[#allocation0]]
  $region38: #{tpu_custom_call.1} parent=0
    _
  %s10 = ssub.s32 1, %s8
  %s11 = scalar_select 0, %s10, %s8
  %v12 = vstv %s6
  %13 = vst [vmem:[#allocation2] sm:$0x1] %v12
  $region1: #{tpu_custom_call.1} parent=0
    #allocation3 [shape = 'u8[512]{0}', space=vmem, size = 0x400, scoped, tag = 'output window, operand 0, single buffered']
    #allocation4 [shape = 's32[1]{0}', space=sflag, size = 0x4, scoped, tag = 'scoped memory for tpu_custom_call.1']
    %14 = vsyncpa [#allocation4], 0
    // Predicated region
    $region2: #{tpu_custom_call.1} parent=1 // pred_check
      _
    $region3: #{tpu_custom_call.1} parent=1 // pred_check_branch
      %16 = sbr.rel (0) target = $region5
    $region4: #{tpu_custom_call.1} parent=1 // pred_region
      _
    $region5: #{tpu_custom_call.1} parent=1 // pred_fallthru
      _
    // Predicated region
    $region6: #{tpu_custom_call.1} parent=1 // pred_check
      _
    $region7: #{tpu_custom_call.1} parent=1 // pred_check_branch
      %18 = sbr.rel (0) target = $region9
    $region8: #{tpu_custom_call.1} parent=1 // pred_region
      _
    $region9: #{tpu_custom_call.1} parent=1 // pred_fallthru
      _
    // Predicated region
    $region10: #{tpu_custom_call.1} parent=1 // pred_check
      _
    $region11: #{tpu_custom_call.1} parent=1 // pred_check_branch
      %20 = sbr.rel (0) target = $region13
    $region12: #{tpu_custom_call.1} parent=1 // pred_region
      _
    $region13: #{tpu_custom_call.1} parent=1 // pred_fallthru
      _
    // Predicated region
    $region14: #{tpu_custom_call.1} parent=1 // pred_check
      _
    $region15: #{tpu_custom_call.1} parent=1 // pred_check_branch
      %22 = sbr.rel (0) target = $region17
    $region16: #{tpu_custom_call.1} parent=1 // pred_region
      _
    $region17: #{tpu_custom_call.1} parent=1 // pred_fallthru
      _
    // Predicated region
    $region18: #{tpu_custom_call.1} parent=1 // pred_check
      _
    $region19: #{tpu_custom_call.1} parent=1 // pred_check_branch
      %24 = sbr.rel (0) target = $region21
    $region20: #{tpu_custom_call.1} parent=1 // pred_region
      _
    $region21: #{tpu_custom_call.1} parent=1 // pred_fallthru
      _
    // Predicated region
    $region22: #{tpu_custom_call.1} parent=1 // pred_check
      _
    $region23: #{tpu_custom_call.1} parent=1 // pred_check_branch
      %26 = sbr.rel (0) target = $region25
    $region24: #{tpu_custom_call.1} parent=1 // pred_region
      _
    $region25: #{tpu_custom_call.1} parent=1 // pred_fallthru
      _
    // Predicated region
    $region26: #{tpu_custom_call.1} parent=1 // pred_check
      _
    $region27: #{tpu_custom_call.1} parent=1 // pred_check_branch
      %28 = sbr.rel (0) target = $region29
    $region28: #{tpu_custom_call.1} parent=1 // pred_region
      _
    $region29: #{tpu_custom_call.1} parent=1 // pred_fallthru
      _
    %v30 = vld [vmem:[%s0] sm:$0xf]
    %v31 = vld [vmem:[%s0 + $0x4] sm:$0xf]
    %v32 = vld [vmem:[%s0 + $0x8] sm:$0xf]
    %v33 = vld [vmem:[%s0 + $0xc] sm:$0xf]
    %v34 = vld [vmem:[%s1] sm:$0xf]
    %v35 = vld [vmem:[%s1 + $0x4] sm:$0xf]
    %v36 = vld [vmem:[%s1 + $0x8] sm:$0xf]
    %v37 = vld [vmem:[%s1 + $0xc] sm:$0xf]
    %v38 = vld [vmem:[%s2] sm:$0xff]
    %v39 = vld [vmem:[%s2 + $0x8] sm:$0xff]
    %v40 = vld [vmem:[%s2 + $0x10] sm:$0xff]
    %v41 = vld [vmem:[%s2 + $0x18] sm:$0xff]
    %43 = vset.pattern.permute.xlu0 0
    %44 = vperm.xlu0 %43, %v38
    %v45 = vpop.permute.xlu0 %44
    %48 = vset.pattern.permute.xlu0 0
    %49 = vperm.xlu0 %48, %v39
    %v50 = vpop.permute.xlu0 %49
    %53 = vset.pattern.permute.xlu0 0
    %54 = vperm.xlu0 %53, %v40
    %v55 = vpop.permute.xlu0 %54
    %58 = vset.pattern.permute.xlu0 0
    %59 = vperm.xlu0 %58, %v41
    %v60 = vpop.permute.xlu0 %59
    %v66 = vunpack.c.l.b16 %v34
    %v67 = vunpack.c.l.b16 %v35
    %v68 = vunpack.c.l.b16 %v36
    %v69 = vunpack.c.l.b16 %v37
    %v70 = vpack.c.b16 %v67, %v66
    %v71 = vpack.c.b16 %v69, %v68
    %v76 = vunpack.c.l.b16 %v30
    %v77 = vunpack.c.l.b16 %v31
    %v78 = vunpack.c.l.b16 %v32
    %v79 = vunpack.c.l.b16 %v33
    %v80 = vpack.c.b16 %v77, %v76
    %v81 = vpack.c.b16 %v79, %v78
    %vm84 = vcmask 261120
    %v86 = vsel %vm84, %v70, 0
    %v89 = vsel %vm84, %v71, 0
    %91 = vmatpush.bf16.msra.mxu0 0
    %92 = vmatpush.bf16.msra.mxu0 0
    %93 = vmatpush.bf16.msra.mxu0 0
    %94 = vmatpush.bf16.msra.mxu0 0
    %95 = vmatpush.bf16.msra.mxu0 0
    %96 = vmatpush.bf16.msra.mxu0 0
    %97 = vmatpush.bf16.msra.mxu0 %v81
    %98 = vmatpush.bf16.msra.mxu0 %v80
    %99 = vmatmul.bf16.gmra.mxu0 %v86
    %v100 = vpop.f32.mrf.mxu0
    %v101 = vadd.f32 %v45, %v100
    %v102 = vpop.f32.mrf.mxu0
    %v103 = vadd.f32 %v50, %v102
    %104 = vmatmul.bf16.gmra.mxu0 %v89
    %v105 = vpop.f32.mrf.mxu0
    %v106 = vadd.f32 %v55, %v105
    %v107 = vpop.f32.mrf.mxu0
    %v108 = vadd.f32 %v60, %v107
    %109 = vdwg.mxu0
    %v110 = vmax.f32 %v101, 0.0
    %v111 = vmax.f32 %v103, 0.0
    %v112 = vmax.f32 %v106, 0.0
    %v113 = vmax.f32 %v108, 0.0
    %v114 = vpack.c.bf16 %v111, %v110
    %v115 = vpack.c.bf16 %v113, %v112
    %v116 = vld [vmem:[%s3] sm:$0xf]
    %v117 = vld [vmem:[%s3 + $0x4] sm:$0xf]
    %v118 = vld [vmem:[%s3 + $0x8] sm:$0xf]
    %v119 = vld [vmem:[%s3 + $0xc] sm:$0xf]
    %v120 = vld [vmem:[%s4] sm:$0xff]
    %v121 = vld [vmem:[%s4 + $0x8] sm:$0xff]
    %v122 = vld [vmem:[%s4 + $0x10] sm:$0xff]
    %v123 = vld [vmem:[%s4 + $0x18] sm:$0xff]
    %125 = vset.pattern.permute.xlu0 0
    %126 = vperm.xlu0 %125, %v120
    %v127 = vpop.permute.xlu0 %126
    %130 = vset.pattern.permute.xlu0 0
    %131 = vperm.xlu0 %130, %v121
    %v132 = vpop.permute.xlu0 %131
    %135 = vset.pattern.permute.xlu0 0
    %136 = vperm.xlu0 %135, %v122
    %v137 = vpop.permute.xlu0 %136
    %140 = vset.pattern.permute.xlu0 0
    %141 = vperm.xlu0 %140, %v123
    %v142 = vpop.permute.xlu0 %141
    %v148 = vunpack.c.l.b16 %v116
    %v149 = vunpack.c.l.b16 %v117
    %v150 = vunpack.c.l.b16 %v118
    %v151 = vunpack.c.l.b16 %v119
    %v152 = vpack.c.b16 %v149, %v148
    %v153 = vpack.c.b16 %v151, %v150
    %v155 = vsel %vm84, %v152, 0
    %v158 = vsel %vm84, %v153, 0
    %160 = vmatpush.bf16.msra.mxu0 0
    %161 = vmatpush.bf16.msra.mxu0 0
    %162 = vmatpush.bf16.msra.mxu0 0
    %163 = vmatpush.bf16.msra.mxu0 0
    %164 = vmatpush.bf16.msra.mxu0 0
    %165 = vmatpush.bf16.msra.mxu0 0
    %166 = vmatpush.bf16.msra.mxu0 %v115
    %167 = vmatpush.bf16.msra.mxu0 %v114
    %168 = vmatmul.bf16.gmra.mxu0 %v155
    %v169 = vpop.f32.mrf.mxu0
    %v170 = vadd.f32 %v127, %v169
    %v171 = vpop.f32.mrf.mxu0
    %v172 = vadd.f32 %v132, %v171
    %173 = vmatmul.bf16.gmra.mxu0 %v158
    %v174 = vpop.f32.mrf.mxu0
    %v175 = vadd.f32 %v137, %v174
    %v176 = vpop.f32.mrf.mxu0
    %v177 = vadd.f32 %v142, %v176
    %178 = vdwg.mxu0
    %v179 = vmax.f32 %v170, 0.0
    %v180 = vmax.f32 %v172, 0.0
    %v181 = vmax.f32 %v175, 0.0
    %v182 = vmax.f32 %v177, 0.0
    %v183 = vpack.c.bf16 %v180, %v179
    %v184 = vpack.c.bf16 %v182, %v181
    %v185 = vld [vmem:[%s5] sm:$0x1]
    %v186 = vld [vmem:[#allocation2] sm:$0x1]
    %188 = vset.pattern.permute.xlu0 0
    %189 = vperm.xlu0 %188, %v186
    %v190 = vpop.permute.xlu0 %189
    %v192 = vperm.slane %v190, 0
    %v194 = vsel %vm84, %v185, 0
    %196 = vmatpush.bf16.msra.mxu0 0
    %197 = vmatpush.bf16.msra.mxu0 0
    %198 = vmatpush.bf16.msra.mxu0 0
    %199 = vmatpush.bf16.msra.mxu0 0
    %200 = vmatpush.bf16.msra.mxu0 0
    %201 = vmatpush.bf16.msra.mxu0 0
    %202 = vmatpush.bf16.msra.mxu0 %v184
    %203 = vmatpush.bf16.msra.mxu0 %v183
    %204 = vmatmul.bf16.gmra.mxu0 %v194
    %v205 = vpop.f32.mrf.mxu0
    %v206 = vadd.f32 %v192, %v205
    %v207 = vpop.f32.mrf.mxu0
    %208 = vdwg.mxu0
    %vm209 = vcmask 57344
    %210 = vst.msk [vmem:[#allocation3] sm:$0x1] %vm209, %v206
    // Predicated region
    $region30: #{tpu_custom_call.1} parent=1 // pred_check
      _
    $region31: #{tpu_custom_call.1} parent=1 // pred_check_branch
      %212 = sbr.rel (0) target = $region33
    $region32: #{tpu_custom_call.1} parent=1 // pred_region
      %214 = vsyncadd [#allocation4], 0
      %s216 = sshll.u32 [#allocation3], 4
      %s217 = int_to_ptr.vmem [resolvable:$true] %s216
      %s218 = sshll.u32 %s7, 4
      %s219 = int_to_ptr.hbm [resolvable:$true] %s218
      %221 = dma.vmem_to_hbm [thread:$0]  %s217, 16, %s219, [#allocation4]
    $region33: #{tpu_custom_call.1} parent=1 // pred_fallthru
      _
    // Predicated region
    $region34: #{tpu_custom_call.1} parent=1 // pred_check
      _
    $region35: #{tpu_custom_call.1} parent=1 // pred_check_branch
      %223 = sbr.rel (0) target = $region37
    $region36: #{tpu_custom_call.1} parent=1 // pred_region
      %225 = dma.done [#allocation4], 16
    $region37: #{tpu_custom_call.1} parent=1 // pred_fallthru
      _
    %226 = vsyncpa [#allocation4], 1

</llo_original>
